<compile_context>
chip_gen: v7x
topology: tpu7x:2x2x1
jax: 0.10.0
libtpu: 0.0.40
codegen_flags: <defaults>
</compile_context>

<pallas_src>
import jax
import jax.numpy as jnp
from jax.experimental import pallas as pl
from jax.experimental.pallas import tpu as pltpu

PADDING_IDX = 15
_LANES = 128
_SUBLANES = 16   # multiple-of-16 row tiles are valid for f32 and bf16 outputs


def _round_up(x, m):
    return ((x + m - 1) // m) * m


def _embed_kernel(idx_ref, tbl_ref, out_ref):
    """idx_ref: (R, G) int32; tbl_ref: (G*vpad, G*D) f32 block-diag; out_ref: (R, G*D)."""
    idx = idx_ref[...]                                   # (R, G) int32
    rows, ngroups = idx.shape
    kdim = tbl_ref.shape[0]
    vpad = kdim // ngroups

    # onehot[r, g*vpad + v] = (idx[r, g] == v).  The per-group column ranges
    # are disjoint, so the per-group compares can simply be summed.
    k_iota = jax.lax.broadcasted_iota(jnp.int32, (rows, kdim), 1)
    onehot = jnp.zeros((rows, kdim), jnp.float32)
    for g in range(ngroups):                             # static loop, G <= 16
        onehot = onehot + (k_iota == idx[:, g:g + 1] + g * vpad).astype(jnp.float32)

    # Gather = grouped one-hot @ block-diagonal table on the MXU.
    # Result row r packs G consecutive embedding rows side-by-side in lanes.
    out = jnp.dot(onehot, tbl_ref[...], preferred_element_type=jnp.float32)
    out_ref[...] = out.astype(out_ref.dtype)


def _build_kernel_table(table):
    """Zero the padding row and lay the table out block-diagonally.

    table: (vocab, D) float.  Returns (kernel_tbl, G, vpad) with kernel_tbl of
    shape (G*vpad, G*D), where G = 128 // D (or 1 if D does not divide 128).
    Tiny and static per set of weights -> can be hoisted out of the hot path.
    """
    vocab, d = table.shape
    tbl = table.astype(jnp.float32).at[PADDING_IDX, :].set(0.0)  # nn.Embedding padding row
    g = _LANES // d if (d < _LANES and _LANES % d == 0) else 1
    vpad = _round_up(vocab, 8)
    padded = jnp.zeros((vpad, d), jnp.float32).at[:vocab, :].set(tbl)
    if g == 1:
        return padded, 1, vpad
    # kernel_tbl[a*vpad + v, b*D : (b+1)*D] = table[v] if a == b else 0
    eye = jnp.eye(g, dtype=jnp.float32)[:, None, :, None]        # (g, 1, g, 1)
    kernel_tbl = eye * padded[None, :, None, :]                  # (g, vpad, g, d)
    return kernel_tbl.reshape(g * vpad, g * d), g, vpad


def nucleotide_embedding(inputs, table, *, rows_per_block=1024,
                         out_dtype=jnp.float32):
    """inputs: int [B, S]; table: float [vocab, D].  Returns out_dtype [B, S, D].

    rows_per_block counts 128-lane grouped rows (each covers G = 128//D tokens);
    the default 1024 gives ~512 KiB output blocks, comfortably inside the
    scoped-VMEM defaults on v5e/v6e/v7x.  Pass out_dtype=jnp.bfloat16 to halve
    HBM writeback if downstream consumers accept bf16.
    """
    b, s = inputs.shape
    vocab, d = table.shape
    n = b * s

    kernel_tbl, g, vpad = _build_kernel_table(table)
    kdim, lanes = kernel_tbl.shape                        # (G*vpad, G*D)

    # Choose the grouped-row tile: big, multiple of 16, clamped for small
    # inputs and for a conservative VMEM budget (double-buffered output).
    m_raw = pl.cdiv(n, g)
    rows = min(_round_up(rows_per_block, _SUBLANES),
               max(_SUBLANES, _round_up(m_raw, _SUBLANES)))
    max_rows = max(_SUBLANES,
                   (8 << 20) // (2 * lanes * 4) // _SUBLANES * _SUBLANES)
    rows = min(rows, max_rows)
    m_pad = _round_up(m_raw, rows)
    n_pad = m_pad * g

    # Flatten + pad the token stream (padded slots hit the zeroed padding row
    # and are sliced off afterwards), then group G tokens per 128-wide row.
    idx_flat = inputs.reshape(-1).astype(jnp.int32)
    if n_pad != n:
        idx_flat = jnp.pad(idx_flat, (0, n_pad - n), constant_values=PADDING_IDX)
    idx_grouped = idx_flat.reshape(m_pad, g)

    grid = (m_pad // rows,)
    out = pl.pallas_call(
        _embed_kernel,
        out_shape=jax.ShapeDtypeStruct((m_pad, lanes), out_dtype),
        grid_spec=pltpu.PrefetchScalarGridSpec(
            num_scalar_prefetch=0,
            grid=grid,
            in_specs=[
                pl.BlockSpec((rows, g), lambda i: (i, 0)),
                pl.BlockSpec((kdim, lanes), lambda i: (0, 0)),
            ],
            out_specs=pl.BlockSpec((rows, lanes), lambda i: (i, 0)),
        ),
        compiler_params=pltpu.CompilerParams(
            dimension_semantics=("parallel",)),
    )(idx_grouped, kernel_tbl)

    out_flat = out.reshape(n_pad, d)
    if n_pad != n:
        out_flat = out_flat[:n]
    return out_flat.reshape(b, s, d)


def make_embedding_table(key, embedding_dim, mlm_mode=False):
    """Init matching nn.Embedding: vocab = 16 (+1 if mlm_mode), padding row zeroed."""
    num_nucleotides = 16
    vocab = num_nucleotides + (1 if mlm_mode else 0)
    table = jax.random.normal(key, (vocab, embedding_dim), dtype=jnp.float32)
    table = table.at[PADDING_IDX].set(0.0)
    return table


def reference(inputs, table):
    emb = table[inputs]                                   # (B, S, D)
    mask = (inputs != PADDING_IDX)[..., None].astype(jnp.float32)
    return emb * mask


if __name__ == "__main__":
    key = jax.random.PRNGKey(0)
    k_tbl, k_idx = jax.random.split(key)

    embedding_dim = 32
    B, S = 2, 8
    mlm_mode = False
    vocab = 16 + (1 if mlm_mode else 0)

    table = make_embedding_table(k_tbl, embedding_dim, mlm_mode=mlm_mode)
    inputs = jax.random.randint(k_idx, (B, S), 0, vocab, dtype=jnp.int32)
    # Force a couple of padding tokens so the padding path is exercised.
    inputs = inputs.at[0, 0].set(PADDING_IDX).at[1, -1].set(PADDING_IDX)

    embed = jax.jit(nucleotide_embedding)
    out = embed(inputs, table)
    jax.block_until_ready(out)

    ref = reference(inputs, table)
    assert out.shape == (B, S, embedding_dim)
    assert jnp.allclose(out, ref, atol=1e-5), "mismatch vs reference"

    print("KERNEL_OK")
</pallas_src>

<mosaic_0001>
module attributes {stable_mosaic.version = 11 : i64} {
  func.func @_embed_kernel(%arg0: i32, %arg1: memref<16x4xi32, #tpu.memory_space<vmem>>, %arg2: memref<64x128xf32, #tpu.memory_space<vmem>>, %arg3: memref<16x128xf32, #tpu.memory_space<vmem>>) attributes {dimension_semantics = [#tpu.dimension_semantics<parallel>], iteration_bounds = array<i64: 1>, scalar_prefetch = 0 : i64, scratch_operands = 0 : i64, tpu.core_type = #tpu.core_type<tc>, window_params = [{transform_indices = @transform_0, window_bounds = array<i64: 16, 4>}, {pipeline_mode = #tpu.pipeline_mode<synchronous>, transform_indices = @transform_1, window_bounds = array<i64: 64, 128>}, {transform_indices = @transform_2, window_bounds = array<i64: 16, 128>}]} {
    %c0 = arith.constant 0 : index
    %c0_0 = arith.constant 0 : index
    %0 = vector.load %arg1[%c0, %c0_0] : memref<16x4xi32, #tpu.memory_space<vmem>>, vector<16x4xi32>
    %1 = tpu.iota {dimensions = array<i32: 1>} : vector<16x64xi32>
    %cst = arith.constant 0.000000e+00 : f32
    %2 = vector.broadcast %cst : f32 to vector<16x64xf32>
    %3 = vector.extract_strided_slice %0 {offsets = [0, 0], sizes = [16, 1], strides = [1, 1]} : vector<16x4xi32> to vector<16x1xi32>
    %c0_i32 = arith.constant 0 : i32
    %4 = vector.broadcast %c0_i32 : i32 to vector<16x1xi32>
    %5 = arith.addi %3, %4 : vector<16x1xi32>
    %6 = vector.broadcast %5 : vector<16x1xi32> to vector<16x64xi32>
    %7 = arith.cmpi eq, %1, %6 : vector<16x64xi32>
    %8 = arith.extui %7 : vector<16x64xi1> to vector<16x64xi32>
    %9 = arith.sitofp %8 : vector<16x64xi32> to vector<16x64xf32>
    %10 = arith.addf %2, %9 : vector<16x64xf32>
    %11 = vector.extract_strided_slice %0 {offsets = [0, 1], sizes = [16, 1], strides = [1, 1]} : vector<16x4xi32> to vector<16x1xi32>
    %c16_i32 = arith.constant 16 : i32
    %12 = vector.broadcast %c16_i32 : i32 to vector<16x1xi32>
    %13 = arith.addi %11, %12 : vector<16x1xi32>
    %14 = vector.broadcast %13 : vector<16x1xi32> to vector<16x64xi32>
    %15 = arith.cmpi eq, %1, %14 : vector<16x64xi32>
    %16 = arith.extui %15 : vector<16x64xi1> to vector<16x64xi32>
    %17 = arith.sitofp %16 : vector<16x64xi32> to vector<16x64xf32>
    %18 = arith.addf %10, %17 : vector<16x64xf32>
    %19 = vector.extract_strided_slice %0 {offsets = [0, 2], sizes = [16, 1], strides = [1, 1]} : vector<16x4xi32> to vector<16x1xi32>
    %c32_i32 = arith.constant 32 : i32
    %20 = vector.broadcast %c32_i32 : i32 to vector<16x1xi32>
    %21 = arith.addi %19, %20 : vector<16x1xi32>
    %22 = vector.broadcast %21 : vector<16x1xi32> to vector<16x64xi32>
    %23 = arith.cmpi eq, %1, %22 : vector<16x64xi32>
    %24 = arith.extui %23 : vector<16x64xi1> to vector<16x64xi32>
    %25 = arith.sitofp %24 : vector<16x64xi32> to vector<16x64xf32>
    %26 = arith.addf %18, %25 : vector<16x64xf32>
    %27 = vector.extract_strided_slice %0 {offsets = [0, 3], sizes = [16, 1], strides = [1, 1]} : vector<16x4xi32> to vector<16x1xi32>
    %c48_i32 = arith.constant 48 : i32
    %28 = vector.broadcast %c48_i32 : i32 to vector<16x1xi32>
    %29 = arith.addi %27, %28 : vector<16x1xi32>
    %30 = vector.broadcast %29 : vector<16x1xi32> to vector<16x64xi32>
    %31 = arith.cmpi eq, %1, %30 : vector<16x64xi32>
    %32 = arith.extui %31 : vector<16x64xi1> to vector<16x64xi32>
    %33 = arith.sitofp %32 : vector<16x64xi32> to vector<16x64xf32>
    %34 = arith.addf %26, %33 : vector<16x64xf32>
    %c0_1 = arith.constant 0 : index
    %c0_2 = arith.constant 0 : index
    %35 = vector.load %arg2[%c0_1, %c0_2] : memref<64x128xf32, #tpu.memory_space<vmem>>, vector<64x128xf32>
    %cst_3 = arith.constant dense<0.000000e+00> : vector<16x128xf32>
    %36 = tpu.matmul %34, %35, %cst_3 {dimension_numbers = #tpu.dot_dimension_numbers<[1], [0], [0], [1], [0, 0, 1, 1], [], []>} : vector<16x64xf32>, vector<64x128xf32>, vector<16x128xf32> -> vector<16x128xf32>
    %c0_4 = arith.constant 0 : index
    %c0_5 = arith.constant 0 : index
    %37 = vector.load %arg3[%c0_4, %c0_5] : memref<16x128xf32, #tpu.memory_space<vmem>>, vector<16x128xf32>
    tpu.vector_store %arg3[%c0_4, %c0_5], %36 {strides = array<i32>} : memref<16x128xf32, #tpu.memory_space<vmem>>, vector<16x128xf32>,
    return
  }
  func.func @transform_0(%arg0: i32) -> (i32, i32) {
    %c0_i32 = arith.constant 0 : i32
    %c0_i32_0 = arith.constant 0 : i32
    return %arg0, %c0_i32 : i32, i32
  }
  func.func @transform_1(%arg0: i32) -> (i32, i32) {
    %c0_i32 = arith.constant 0 : i32
    %c0_i32_0 = arith.constant 0 : i32
    %c0_i32_1 = arith.constant 0 : i32
    return %c0_i32, %c0_i32_0 : i32, i32
  }
  func.func @transform_2(%arg0: i32) -> (i32, i32) {
    %c0_i32 = arith.constant 0 : i32
    %c0_i32_0 = arith.constant 0 : i32
    return %arg0, %c0_i32 : i32, i32
  }
}

</mosaic_0001>

<llo_original>
// kernel: nucleotide_embedding.1
$region0: #{nucleotide_embedding.1}
  #allocation0 [shape = 'u32[]', space=smem, size = 0x4, offset = 0x4, fixed_abs, tag = 'smem constant byte address 0x4 - core index']
  #allocation1 [shape = 'u32[144,128]{1,0:T(1,128)}', space=vmem, size = 0x12000, scoped, tag = 'internal scratch']
  %s0 = inlined_call_operand.vmem [shape: s32[16,4], index: 0, kind: input, shape index: {}]
  %s1 = inlined_call_operand.vmem [shape: f32[64,128], index: 1, kind: input, shape index: {}]
  %s2 = inlined_call_operand.vmem [shape: f32[16,128], index: 2, kind: output, shape index: {}]
  %s3 = sld [smem:[#allocation0]]
  $region18: #{nucleotide_embedding.1} parent=0
    _
  %s5 = ssub.s32 1, %s3
  %s6 = scalar_select 0, %s5, %s3
  // Predicated region
  $region2: #{nucleotide_embedding.1} parent=0 // pred_check
    _
  $region3: #{nucleotide_embedding.1} parent=0 // pred_check_branch
    %8 = sbr.rel (0) target = $region5
  $region4: #{nucleotide_embedding.1} parent=0 // pred_region
    _
  $region5: #{nucleotide_embedding.1} parent=0 // pred_fallthru
    _
  // Predicated region
  $region6: #{nucleotide_embedding.1} parent=0 // pred_check
    _
  $region7: #{nucleotide_embedding.1} parent=0 // pred_check_branch
    %10 = sbr.rel (0) target = $region9
  $region8: #{nucleotide_embedding.1} parent=0 // pred_region
    _
  $region9: #{nucleotide_embedding.1} parent=0 // pred_fallthru
    _
  %v11 = vld [vmem:[%s0] sm:$0xff]
  %v12 = vld [vmem:[%s0 + $0x8] sm:$0xff]
  %v13 = vlaneseq
  %v14 = vand.u32 %v13, 127
  %15 = vset.pattern.permute.xlu0 0
  %16 = vperm.xlu0 %15, %v11
  %v17 = vpop.permute.xlu0 %16
  %18 = vset.pattern.permute.xlu0 0
  %19 = vperm.xlu0 %18, %v12
  %v20 = vpop.permute.xlu0 %19
  %vm21 = vcmp.eq.s32.totalorder %v14, %v17
  %vm22 = vcmp.eq.s32.totalorder %v14, %v20
  %v23 = vsel %vm21, 1, 0
  %v24 = vsel %vm22, 1, 0
  %v25 = vcvt.s32.f32 %v23
  %v26 = vcvt.s32.f32 %v24
  %v27 = vadd.f32 %v25, 0.0
  %v28 = vadd.f32 %v26, 0.0
  %v29 = vadd.s32 %v11, 16
  %v30 = vadd.s32 %v12, 16
  %31 = vset.pattern.permute.xlu0 1
  %32 = vperm.xlu0 %31, %v29
  %v33 = vpop.permute.xlu0 %32
  %34 = vset.pattern.permute.xlu0 1
  %35 = vperm.xlu0 %34, %v30
  %v36 = vpop.permute.xlu0 %35
  %vm37 = vcmp.eq.s32.totalorder %v14, %v33
  %vm38 = vcmp.eq.s32.totalorder %v14, %v36
  %v39 = vsel %vm37, 1, 0
  %v40 = vsel %vm38, 1, 0
  %v41 = vcvt.s32.f32 %v39
  %v42 = vcvt.s32.f32 %v40
  %v43 = vadd.f32 %v27, %v41
  %v44 = vadd.f32 %v28, %v42
  %v45 = vadd.s32 %v11, 32
  %v46 = vadd.s32 %v12, 32
  %47 = vset.pattern.permute.xlu0 2
  %48 = vperm.xlu0 %47, %v45
  %v49 = vpop.permute.xlu0 %48
  %50 = vset.pattern.permute.xlu0 2
  %51 = vperm.xlu0 %50, %v46
  %v52 = vpop.permute.xlu0 %51
  %vm53 = vcmp.eq.s32.totalorder %v14, %v49
  %vm54 = vcmp.eq.s32.totalorder %v14, %v52
  %v55 = vsel %vm53, 1, 0
  %v56 = vsel %vm54, 1, 0
  %v57 = vcvt.s32.f32 %v55
  %v58 = vcvt.s32.f32 %v56
  %v59 = vadd.f32 %v43, %v57
  %v60 = vadd.f32 %v44, %v58
  %v61 = vadd.s32 %v11, 48
  %v62 = vadd.s32 %v12, 48
  %63 = vset.pattern.permute.xlu0 3
  %64 = vperm.xlu0 %63, %v61
  %v65 = vpop.permute.xlu0 %64
  %66 = vset.pattern.permute.xlu0 3
  %67 = vperm.xlu0 %66, %v62
  %v68 = vpop.permute.xlu0 %67
  %vm69 = vcmp.eq.s32.totalorder %v14, %v65
  %vm70 = vcmp.eq.s32.totalorder %v14, %v68
  %v71 = vsel %vm69, 1, 0
  %v72 = vsel %vm70, 1, 0
  %v73 = vcvt.s32.f32 %v71
  %v74 = vcvt.s32.f32 %v72
  %v75 = vadd.f32 %v59, %v73
  %v76 = vadd.f32 %v60, %v74
  %v77 = vld [vmem:[%s1] sm:$0xff]
  %v78 = vld [vmem:[%s1 + $0x8] sm:$0xff]
  %v79 = vld [vmem:[%s1 + $0x10] sm:$0xff]
  %v80 = vld [vmem:[%s1 + $0x18] sm:$0xff]
  %v81 = vld [vmem:[%s1 + $0x20] sm:$0xff]
  %v82 = vld [vmem:[%s1 + $0x28] sm:$0xff]
  %v83 = vld [vmem:[%s1 + $0x30] sm:$0xff]
  %v84 = vld [vmem:[%s1 + $0x38] sm:$0xff]
  %vm85 = vcmask 523264
  %v87 = vsel %vm85, %v75, 0
  %v90 = vsel %vm85, %v76, 0
  %92 = vmatprep.subr.mxu0 0.0
  %93 = vmatpush1.msra.mxu0 %v77
  %94 = vmatprep.subr.mxu0 0.0
  %95 = vmatpush1.msra.mxu0 %v78
  %96 = vmatprep.subr.mxu0 0.0
  %97 = vmatpush1.msra.mxu0 %v79
  %98 = vmatprep.subr.mxu0 0.0
  %99 = vmatpush1.msra.mxu0 %v80
  %100 = vmatprep.subr.mxu0 0.0
  %101 = vmatpush1.msra.mxu0 %v81
  %102 = vmatprep.subr.mxu0 0.0
  %103 = vmatpush1.msra.mxu0 %v82
  %104 = vmatprep.subr.mxu0 0.0
  %105 = vmatpush1.msra.mxu0 %v83
  %106 = vmatprep.subr.mxu0 0.0
  %107 = vmatpush1.msra.mxu0 %v84
  %108 = vmatprep.subr.mxu0 0.0
  %109 = vmatpush1.msra.mxu0 0.0
  %110 = vmatprep.subr.mxu0 0.0
  %111 = vmatpush1.msra.mxu0 0.0
  %112 = vmatprep.subr.mxu0 0.0
  %113 = vmatpush1.msra.mxu0 0.0
  %114 = vmatprep.subr.mxu0 0.0
  %115 = vmatpush1.msra.mxu0 0.0
  %116 = vmatprep.subr.mxu0 0.0
  %117 = vmatpush1.msra.mxu0 0.0
  %118 = vmatprep.subr.mxu0 0.0
  %119 = vmatpush1.msra.mxu0 0.0
  %120 = vmatprep.subr.mxu0 0.0
  %121 = vmatpush1.msra.mxu0 0.0
  %122 = vmatprep.subr.mxu0 0.0
  %123 = vmatpush1.msra.mxu0 0.0
  %124 = vmatprep.subr.mxu0 0.0
  %125 = vmatpush1.msra.mxu0 0.0
  %126 = vmatprep.subr.mxu0 0.0
  %127 = vmatpush1.msra.mxu0 0.0
  %128 = vmatprep.subr.mxu0 0.0
  %129 = vmatpush1.msra.mxu0 0.0
  %130 = vmatprep.subr.mxu0 0.0
  %131 = vmatpush1.msra.mxu0 0.0
  %132 = vmatprep.subr.mxu0 0.0
  %133 = vmatpush1.msra.mxu0 0.0
  %134 = vmatprep.subr.mxu0 0.0
  %135 = vmatpush1.msra.mxu0 0.0
  %136 = vmatprep.subr.mxu0 0.0
  %137 = vmatpush1.msra.mxu0 0.0
  %138 = vmatprep.subr.mxu0 0.0
  %139 = vmatpush1.msra.mxu0 0.0
  %140 = vmatprep.subr.mxu0 0.0
  %141 = vmatpush1.msra.mxu0 0.0
  %142 = vmatprep.subr.mxu0 0.0
  %143 = vmatpush1.msra.mxu0 0.0
  %144 = vmatprep.subr.mxu0 0.0
  %145 = vmatpush1.msra.mxu0 0.0
  %146 = vmatprep.subr.mxu0 0.0
  %147 = vmatpush1.msra.mxu0 0.0
  %148 = vmatprep.subr.mxu0 0.0
  %149 = vmatpush1.msra.mxu0 0.0
  %150 = vmatprep.subr.mxu0 0.0
  %151 = vmatpush1.msra.mxu0 0.0
  %152 = vmatprep.subr.mxu0 0.0
  %153 = vmatpush1.msra.mxu0 0.0
  %154 = vmatprep.subr.mxu0 0.0
  %155 = vmatpush1.msra.mxu0 0.0
  %156 = vmatprep.mubr.f32.mxu0 0.0
  %157 = vmatmul.mubr.f32.gmra.mrb[0].mxu0 %v87
  %v158 = vpop.f32.mrb[0].mxu0
  %v159 = vadd.f32 0.0, %v158
  %v160 = vpop.f32.mrb[0].mxu0
  %161 = vmatprep.mubr.f32.mxu0 0.0
  %162 = vmatmul.mubr.f32.gmra.mrb[0].mxu0 %v90
  %v163 = vpop.f32.mrb[0].mxu0
  %v164 = vadd.f32 0.0, %v163
  %v165 = vpop.f32.mrb[0].mxu0
  %166 = vdwg.mxu0
  %167 = vst [vmem:[%s2] sm:$0xff] %v159
  %168 = vst [vmem:[%s2 + $0x8] sm:$0xff] %v164
  // Predicated region
  $region10: #{nucleotide_embedding.1} parent=0 // pred_check
    _
  $region11: #{nucleotide_embedding.1} parent=0 // pred_check_branch
    %170 = sbr.rel (0) target = $region13
  $region12: #{nucleotide_embedding.1} parent=0 // pred_region
    _
  $region13: #{nucleotide_embedding.1} parent=0 // pred_fallthru
    _
  // Predicated region
  $region14: #{nucleotide_embedding.1} parent=0 // pred_check
    _
  $region15: #{nucleotide_embedding.1} parent=0 // pred_check_branch
    %172 = sbr.rel (0) target = $region17
  $region16: #{nucleotide_embedding.1} parent=0 // pred_region
    _
  $region17: #{nucleotide_embedding.1} parent=0 // pred_fallthru
    _

</llo_original>
